<compile_context>
chip_gen: v7x
topology: tpu7x:2x2x1
jax: 0.10.0
libtpu: 0.0.40
codegen_flags: <defaults>
</compile_context>

<pallas_src>
import jax
import jax.numpy as jnp
from jax.experimental import pallas as pl
from jax.experimental.pallas import tpu as pltpu


N_TRACK = 10
N_WAYPOINTS = 3
HALF_INPUT = 2 * N_TRACK          # 20 features per side (x, y per track point)
INPUT_SIZE = 2 * HALF_INPUT       # 40
HIDDEN_SIZE = 64
OUTPUT_SIZE = N_WAYPOINTS * 2     # 6

MAX_TILE_B = 4096                 # rows per grid step (multiple of 8)
VMEM_LIMIT_BYTES = 48 << 20       # explicit scoped-VMEM budget (ok on v5e/v6e/v7x)


def _round_up(x, m):
    return (x + m - 1) // m * m


def _mlp_kernel(xl_ref, xr_ref, w1l_ref, w1r_ref, b1_ref,
                w2_ref, b2_ref, w3_ref, b3_ref, out_ref):
    # In-kernel cast: inputs arrive as f32 (single HBM pass), MXU runs bf16.
    xl = xl_ref[...].astype(jnp.bfloat16)
    xr = xr_ref[...].astype(jnp.bfloat16)

    # fc1 split over left/right halves (replaces the wrapper-side concat) + ReLU
    h1 = (jnp.dot(xl, w1l_ref[...], preferred_element_type=jnp.float32)
          + jnp.dot(xr, w1r_ref[...], preferred_element_type=jnp.float32)
          + b1_ref[...])
    h1 = jnp.maximum(h1, 0.0).astype(jnp.bfloat16)

    # fc2 + ReLU
    h2 = jnp.dot(h1, w2_ref[...], preferred_element_type=jnp.float32) + b2_ref[...]
    h2 = jnp.maximum(h2, 0.0).astype(jnp.bfloat16)

    # fc3 (no activation), f32 out
    y = jnp.dot(h2, w3_ref[...], preferred_element_type=jnp.float32) + b3_ref[...]
    out_ref[...] = y.astype(out_ref.dtype)


def _choose_tile_b(b_pad8):
    """Pick a batch tile: <= MAX_TILE_B, multiple of 8, and (when the batch
    allows) small enough that the grid has >= 2 steps for v7x megacore."""
    half = _round_up(pl.cdiv(b_pad8, 2), 8)
    return max(8, min(MAX_TILE_B, half))


def mlp_planner_forward(track_left, track_right, kernel_params):
    """track_left, track_right: (b, n_track, 2) f32 -> (b, n_waypoints, 2) f32."""
    b = track_left.shape[0]
    w1l, w1r, b1, w2, b2, w3, b3 = kernel_params

    # (b, n_track, 2) -> (b, 20) is a free view; stays f32 (cast happens in-kernel).
    xl = track_left.reshape(b, HALF_INPUT)
    xr = track_right.reshape(b, HALF_INPUT)

    b_pad8 = _round_up(max(b, 1), 8)
    tile_b = _choose_tile_b(b_pad8)
    # Pad the batch to a multiple of tile_b so every grid block is full and
    # in-bounds (no masked partial tiles); only pay jnp.pad when misaligned.
    b_pad = _round_up(b_pad8, tile_b)
    if b_pad != b:
        pad = ((0, b_pad - b), (0, 0))
        xl = jnp.pad(xl, pad)
        xr = jnp.pad(xr, pad)

    grid = (b_pad // tile_b,)

    x_spec = pl.BlockSpec((tile_b, HALF_INPUT), lambda i: (i, 0))
    out_spec = pl.BlockSpec((tile_b, OUTPUT_SIZE), lambda i: (i, 0))

    def resident(arr):
        # Whole-array block with constant index -> fetched once, stays in VMEM.
        nd = arr.ndim
        return pl.BlockSpec(arr.shape, lambda i, _nd=nd: (0,) * _nd)

    weights = (w1l, w1r, b1, w2, b2, w3, b3)
    weight_bytes = sum(int(w.size) * w.dtype.itemsize for w in weights)
    cost = pl.CostEstimate(
        flops=int(2 * b_pad * (INPUT_SIZE * HIDDEN_SIZE
                               + HIDDEN_SIZE * HIDDEN_SIZE
                               + HIDDEN_SIZE * OUTPUT_SIZE)),
        transcendentals=0,
        bytes_accessed=int(b_pad * (2 * HALF_INPUT * 4 + OUTPUT_SIZE * 4)
                           + weight_bytes),
    )

    out_flat = pl.pallas_call(
        _mlp_kernel,
        out_shape=jax.ShapeDtypeStruct((b_pad, OUTPUT_SIZE), jnp.float32),
        grid=grid,
        in_specs=[x_spec, x_spec,
                  resident(w1l), resident(w1r), resident(b1),
                  resident(w2), resident(b2),
                  resident(w3), resident(b3)],
        out_specs=out_spec,
        compiler_params=pltpu.CompilerParams(
            dimension_semantics=("parallel",),
            vmem_limit_bytes=VMEM_LIMIT_BYTES),
        cost_estimate=cost,
    )(xl, xr, w1l, w1r, b1, w2, b2, w3, b3)

    return out_flat[:b].reshape(b, N_WAYPOINTS, 2)


def init_params(key):
    """Deterministic init mimicking nn.Linear's uniform(-1/sqrt(fan_in), ...).
    Weights stored as (in, out) so forward is x @ W + b (== PyTorch x @ W.T)."""
    ks = jax.random.split(key, 6)

    def linear(kw, kb, fan_in, fan_out):
        bound = 1.0 / jnp.sqrt(fan_in)
        w = jax.random.uniform(kw, (fan_in, fan_out), jnp.float32, -bound, bound)
        b = jax.random.uniform(kb, (1, fan_out), jnp.float32, -bound, bound)
        return w, b

    w1, b1 = linear(ks[0], ks[1], INPUT_SIZE, HIDDEN_SIZE)
    w2, b2 = linear(ks[2], ks[3], HIDDEN_SIZE, HIDDEN_SIZE)
    w3, b3 = linear(ks[4], ks[5], HIDDEN_SIZE, OUTPUT_SIZE)
    return (w1, b1, w2, b2, w3, b3)


def prepare_kernel_params(params):
    """One-time repack outside the hot path.

    torch.cat((track_left, track_right), dim=2) on (b, 10, 2) tensors
    interleaves features per track point as [lx_i, ly_i, rx_i, ry_i], so W1's
    rows are regrouped into the rows that see the left features and the rows
    that see the right features (validated against the f32 cat(dim=2)
    reference in __main__).  Weights are cast to bf16 (native MXU precision);
    biases stay f32 and are added after the f32 accumulation."""
    w1, b1, w2, b2, w3, b3 = params
    w1g = w1.reshape(N_TRACK, 4, HIDDEN_SIZE)
    w1_left = w1g[:, 0:2, :].reshape(HALF_INPUT, HIDDEN_SIZE).astype(jnp.bfloat16)
    w1_right = w1g[:, 2:4, :].reshape(HALF_INPUT, HIDDEN_SIZE).astype(jnp.bfloat16)
    return (w1_left, w1_right, b1,
            w2.astype(jnp.bfloat16), b2,
            w3.astype(jnp.bfloat16), b3)


def _reference_f32(track_left, track_right, params):
    """PyTorch-equivalent full-f32 math."""
    b = track_left.shape[0]
    w1, b1, w2, b2, w3, b3 = params
    x = jnp.concatenate([track_left, track_right], axis=2).reshape(b, -1)
    h = jnp.maximum(x @ w1 + b1, 0.0)
    h = jnp.maximum(h @ w2 + b2, 0.0)
    return (h @ w3 + b3).reshape(b, N_WAYPOINTS, 2)


if __name__ == "__main__":
    key = jax.random.PRNGKey(0)
    k_params, k_left, k_right = jax.random.split(key, 3)

    batch = 2
    track_left = jax.random.normal(k_left, (batch, N_TRACK, 2), jnp.float32)
    track_right = jax.random.normal(k_right, (batch, N_TRACK, 2), jnp.float32)

    params = init_params(k_params)
    kparams = prepare_kernel_params(params)

    waypoints = mlp_planner_forward(track_left, track_right, kparams)
    waypoints = jax.block_until_ready(waypoints)
    assert waypoints.shape == (batch, N_WAYPOINTS, 2)

    # Reference 1: identical math (bf16 operands, f32 accumulation), tight tol.
    w1l, w1r, b1b, w2b, b2b, w3b, b3b = kparams
    xl = track_left.reshape(batch, HALF_INPUT).astype(jnp.bfloat16)
    xr = track_right.reshape(batch, HALF_INPUT).astype(jnp.bfloat16)
    h = (jnp.dot(xl, w1l, preferred_element_type=jnp.float32)
         + jnp.dot(xr, w1r, preferred_element_type=jnp.float32) + b1b)
    h = jnp.maximum(h, 0.0).astype(jnp.bfloat16)
    h = jnp.maximum(jnp.dot(h, w2b, preferred_element_type=jnp.float32) + b2b,
                    0.0).astype(jnp.bfloat16)
    ref_bf16 = (jnp.dot(h, w3b, preferred_element_type=jnp.float32) + b3b
                ).reshape(batch, N_WAYPOINTS, 2)
    assert jnp.allclose(waypoints, ref_bf16, atol=1e-3, rtol=1e-3)

    # Reference 2: full-f32 PyTorch-equivalent math (cat dim=2), loose tol (bf16).
    ref_f32 = _reference_f32(track_left, track_right, params)
    assert jnp.allclose(waypoints, ref_f32, atol=5e-2, rtol=5e-2)

    # Exercise the multi-tile path (padding to a tile multiple + grid of 2 steps).
    batch2 = 24
    kl2, kr2 = jax.random.split(jax.random.PRNGKey(1), 2)
    tl2 = jax.random.normal(kl2, (batch2, N_TRACK, 2), jnp.float32)
    tr2 = jax.random.normal(kr2, (batch2, N_TRACK, 2), jnp.float32)
    wp2 = jax.block_until_ready(mlp_planner_forward(tl2, tr2, kparams))
    assert wp2.shape == (batch2, N_WAYPOINTS, 2)
    assert jnp.allclose(wp2, _reference_f32(tl2, tr2, params), atol=5e-2, rtol=5e-2)

    print("KERNEL_OK")
</pallas_src>

<mosaic_0001>
module attributes {stable_mosaic.version = 11 : i64} {
  func.func @_mlp_kernel(%arg0: i32, %arg1: memref<8x20xf32, #tpu.memory_space<vmem>>, %arg2: memref<8x20xf32, #tpu.memory_space<vmem>>, %arg3: memref<20x64xbf16, #tpu.memory_space<vmem>>, %arg4: memref<20x64xbf16, #tpu.memory_space<vmem>>, %arg5: memref<1x64xf32, #tpu.memory_space<vmem>>, %arg6: memref<64x64xbf16, #tpu.memory_space<vmem>>, %arg7: memref<1x64xf32, #tpu.memory_space<vmem>>, %arg8: memref<64x6xbf16, #tpu.memory_space<vmem>>, %arg9: memref<1x6xf32, #tpu.memory_space<vmem>>, %arg10: memref<8x6xf32, #tpu.memory_space<vmem>>) attributes {dimension_semantics = [#tpu.dimension_semantics<parallel>], iteration_bounds = array<i64: 1>, scalar_prefetch = 0 : i64, scratch_operands = 0 : i64, tpu.core_type = #tpu.core_type<tc>, window_params = [{transform_indices = @transform_0, window_bounds = array<i64: 8, 20>}, {transform_indices = @transform_1, window_bounds = array<i64: 8, 20>}, {pipeline_mode = #tpu.pipeline_mode<synchronous>, transform_indices = @transform_2, window_bounds = array<i64: 20, 64>}, {pipeline_mode = #tpu.pipeline_mode<synchronous>, transform_indices = @transform_3, window_bounds = array<i64: 20, 64>}, {pipeline_mode = #tpu.pipeline_mode<synchronous>, transform_indices = @transform_4, window_bounds = array<i64: 1, 64>}, {pipeline_mode = #tpu.pipeline_mode<synchronous>, transform_indices = @transform_5, window_bounds = array<i64: 64, 64>}, {pipeline_mode = #tpu.pipeline_mode<synchronous>, transform_indices = @transform_6, window_bounds = array<i64: 1, 64>}, {pipeline_mode = #tpu.pipeline_mode<synchronous>, transform_indices = @transform_7, window_bounds = array<i64: 64, 6>}, {pipeline_mode = #tpu.pipeline_mode<synchronous>, transform_indices = @transform_8, window_bounds = array<i64: 1, 6>}, {transform_indices = @transform_9, window_bounds = array<i64: 8, 6>}]} {
    %c0 = arith.constant 0 : index
    %c0_0 = arith.constant 0 : index
    %0 = vector.load %arg1[%c0, %c0_0] : memref<8x20xf32, #tpu.memory_space<vmem>>, vector<8x20xf32>
    %1 = arith.truncf %0 : vector<8x20xf32> to vector<8x20xbf16>
    %c0_1 = arith.constant 0 : index
    %c0_2 = arith.constant 0 : index
    %2 = vector.load %arg2[%c0_1, %c0_2] : memref<8x20xf32, #tpu.memory_space<vmem>>, vector<8x20xf32>
    %3 = arith.truncf %2 : vector<8x20xf32> to vector<8x20xbf16>
    %c0_3 = arith.constant 0 : index
    %c0_4 = arith.constant 0 : index
    %4 = vector.load %arg3[%c0_3, %c0_4] : memref<20x64xbf16, #tpu.memory_space<vmem>>, vector<20x64xbf16>
    %cst = arith.constant dense<0.000000e+00> : vector<8x64xf32>
    %5 = tpu.matmul %1, %4, %cst {dimension_numbers = #tpu.dot_dimension_numbers<[1], [0], [0], [1], [0, 0, 1, 1], [], []>} : vector<8x20xbf16>, vector<20x64xbf16>, vector<8x64xf32> -> vector<8x64xf32>
    %c0_5 = arith.constant 0 : index
    %c0_6 = arith.constant 0 : index
    %6 = vector.load %arg4[%c0_5, %c0_6] : memref<20x64xbf16, #tpu.memory_space<vmem>>, vector<20x64xbf16>
    %cst_7 = arith.constant dense<0.000000e+00> : vector<8x64xf32>
    %7 = tpu.matmul %3, %6, %cst_7 {dimension_numbers = #tpu.dot_dimension_numbers<[1], [0], [0], [1], [0, 0, 1, 1], [], []>} : vector<8x20xbf16>, vector<20x64xbf16>, vector<8x64xf32> -> vector<8x64xf32>
    %8 = arith.addf %5, %7 : vector<8x64xf32>
    %c0_8 = arith.constant 0 : index
    %c0_9 = arith.constant 0 : index
    %9 = vector.load %arg5[%c0_8, %c0_9] : memref<1x64xf32, #tpu.memory_space<vmem>>, vector<1x64xf32>
    %10 = vector.broadcast %9 : vector<1x64xf32> to vector<8x64xf32>
    %11 = arith.addf %8, %10 : vector<8x64xf32>
    %cst_10 = arith.constant 0.000000e+00 : f32
    %12 = vector.broadcast %cst_10 : f32 to vector<8x64xf32>
    %13 = arith.maximumf %11, %12 : vector<8x64xf32>
    %14 = arith.truncf %13 : vector<8x64xf32> to vector<8x64xbf16>
    %c0_11 = arith.constant 0 : index
    %c0_12 = arith.constant 0 : index
    %15 = vector.load %arg6[%c0_11, %c0_12] : memref<64x64xbf16, #tpu.memory_space<vmem>>, vector<64x64xbf16>
    %cst_13 = arith.constant dense<0.000000e+00> : vector<8x64xf32>
    %16 = tpu.matmul %14, %15, %cst_13 {dimension_numbers = #tpu.dot_dimension_numbers<[1], [0], [0], [1], [0, 0, 1, 1], [], []>} : vector<8x64xbf16>, vector<64x64xbf16>, vector<8x64xf32> -> vector<8x64xf32>
    %c0_14 = arith.constant 0 : index
    %c0_15 = arith.constant 0 : index
    %17 = vector.load %arg7[%c0_14, %c0_15] : memref<1x64xf32, #tpu.memory_space<vmem>>, vector<1x64xf32>
    %18 = vector.broadcast %17 : vector<1x64xf32> to vector<8x64xf32>
    %19 = arith.addf %16, %18 : vector<8x64xf32>
    %cst_16 = arith.constant 0.000000e+00 : f32
    %20 = vector.broadcast %cst_16 : f32 to vector<8x64xf32>
    %21 = arith.maximumf %19, %20 : vector<8x64xf32>
    %22 = arith.truncf %21 : vector<8x64xf32> to vector<8x64xbf16>
    %c0_17 = arith.constant 0 : index
    %c0_18 = arith.constant 0 : index
    %23 = vector.load %arg8[%c0_17, %c0_18] : memref<64x6xbf16, #tpu.memory_space<vmem>>, vector<64x6xbf16>
    %cst_19 = arith.constant dense<0.000000e+00> : vector<8x6xf32>
    %24 = tpu.matmul %22, %23, %cst_19 {dimension_numbers = #tpu.dot_dimension_numbers<[1], [0], [0], [1], [0, 0, 1, 1], [], []>} : vector<8x64xbf16>, vector<64x6xbf16>, vector<8x6xf32> -> vector<8x6xf32>
    %c0_20 = arith.constant 0 : index
    %c0_21 = arith.constant 0 : index
    %25 = vector.load %arg9[%c0_20, %c0_21] : memref<1x6xf32, #tpu.memory_space<vmem>>, vector<1x6xf32>
    %26 = vector.broadcast %25 : vector<1x6xf32> to vector<8x6xf32>
    %27 = arith.addf %24, %26 : vector<8x6xf32>
    %c0_22 = arith.constant 0 : index
    %c0_23 = arith.constant 0 : index
    %28 = vector.load %arg10[%c0_22, %c0_23] : memref<8x6xf32, #tpu.memory_space<vmem>>, vector<8x6xf32>
    tpu.vector_store %arg10[%c0_22, %c0_23], %27 {strides = array<i32>} : memref<8x6xf32, #tpu.memory_space<vmem>>, vector<8x6xf32>,
    return
  }
  func.func @transform_0(%arg0: i32) -> (i32, i32) {
    %c0_i32 = arith.constant 0 : i32
    %c0_i32_0 = arith.constant 0 : i32
    return %arg0, %c0_i32 : i32, i32
  }
  func.func @transform_1(%arg0: i32) -> (i32, i32) {
    %c0_i32 = arith.constant 0 : i32
    %c0_i32_0 = arith.constant 0 : i32
    return %arg0, %c0_i32 : i32, i32
  }
  func.func @transform_2(%arg0: i32) -> (i32, i32) {
    %c0_i32 = arith.constant 0 : i32
    %c0_i32_0 = arith.constant 0 : i32
    %c0_i32_1 = arith.constant 0 : i32
    return %c0_i32, %c0_i32_0 : i32, i32
  }
  func.func @transform_3(%arg0: i32) -> (i32, i32) {
    %c0_i32 = arith.constant 0 : i32
    %c0_i32_0 = arith.constant 0 : i32
    %c0_i32_1 = arith.constant 0 : i32
    return %c0_i32, %c0_i32_0 : i32, i32
  }
  func.func @transform_4(%arg0: i32) -> (i32, i32) {
    %c0_i32 = arith.constant 0 : i32
    %c0_i32_0 = arith.constant 0 : i32
    %c0_i32_1 = arith.constant 0 : i32
    return %c0_i32, %c0_i32_0 : i32, i32
  }
  func.func @transform_5(%arg0: i32) -> (i32, i32) {
    %c0_i32 = arith.constant 0 : i32
    %c0_i32_0 = arith.constant 0 : i32
    %c0_i32_1 = arith.constant 0 : i32
    return %c0_i32, %c0_i32_0 : i32, i32
  }
  func.func @transform_6(%arg0: i32) -> (i32, i32) {
    %c0_i32 = arith.constant 0 : i32
    %c0_i32_0 = arith.constant 0 : i32
    %c0_i32_1 = arith.constant 0 : i32
    return %c0_i32, %c0_i32_0 : i32, i32
  }
  func.func @transform_7(%arg0: i32) -> (i32, i32) {
    %c0_i32 = arith.constant 0 : i32
    %c0_i32_0 = arith.constant 0 : i32
    %c0_i32_1 = arith.constant 0 : i32
    return %c0_i32, %c0_i32_0 : i32, i32
  }
  func.func @transform_8(%arg0: i32) -> (i32, i32) {
    %c0_i32 = arith.constant 0 : i32
    %c0_i32_0 = arith.constant 0 : i32
    %c0_i32_1 = arith.constant 0 : i32
    return %c0_i32, %c0_i32_0 : i32, i32
  }
  func.func @transform_9(%arg0: i32) -> (i32, i32) {
    %c0_i32 = arith.constant 0 : i32
    %c0_i32_0 = arith.constant 0 : i32
    return %arg0, %c0_i32 : i32, i32
  }
}

</mosaic_0001>

<llo_original>
// kernel: tpu_custom_call.1
$region0: #{tpu_custom_call.1}
  #allocation0 [shape = 'u32[]', space=smem, size = 0x4, offset = 0x4, fixed_abs, tag = 'smem constant byte address 0x4 - core index']
  #allocation1 [shape = 'u32[144,128]{1,0:T(1,128)}', space=vmem, size = 0x12000, scoped, tag = 'internal scratch']
  %s0 = inlined_call_operand.vmem [shape: f32[8,20], index: 0, kind: input, shape index: {}]
  %s1 = inlined_call_operand.hbm [shape: f32[8,20], index: 1, kind: input, shape index: {}]
  %s2 = inlined_call_operand.vmem [shape: bf16[20,64], index: 2, kind: input, shape index: {}]
  %s3 = inlined_call_operand.hbm [shape: bf16[20,64], index: 3, kind: input, shape index: {}]
  %s4 = inlined_call_operand.vmem [shape: f32[1,64], index: 4, kind: input, shape index: {}]
  %s5 = inlined_call_operand.vmem [shape: bf16[64,64], index: 5, kind: input, shape index: {}]
  %s6 = inlined_call_operand.vmem [shape: f32[1,64], index: 6, kind: input, shape index: {}]
  %s7 = inlined_call_operand.vmem [shape: bf16[64,6], index: 7, kind: input, shape index: {}]
  %s8 = inlined_call_operand.vmem [shape: f32[1,6], index: 8, kind: input, shape index: {}]
  %s9 = inlined_call_operand.hbm [shape: f32[8,6], index: 9, kind: output, shape index: {}]
  %s10 = sld [smem:[#allocation0]]
  $region54: #{tpu_custom_call.1} parent=0
    _
  %s12 = ssub.s32 1, %s10
  %s13 = scalar_select 0, %s12, %s10
  $region1: #{tpu_custom_call.1} parent=0
    #allocation2 [shape = 'u8[4096]{0}', space=vmem, size = 0x1000, scoped, tag = 'input window, operand 1, single buffered']
    #allocation3 [shape = 's32[1]{0}', space=sflag, size = 0x4, scoped, tag = 'scoped memory for tpu_custom_call.1']
    #allocation4 [shape = 's32[1]{0}', space=sflag, size = 0x4, scoped, tag = 'scoped memory for tpu_custom_call.1']
    #allocation5 [shape = 'u8[6144]{0}', space=vmem, size = 0x1800, scoped, tag = 'input window, operand 3, single buffered']
    #allocation6 [shape = 's32[1]{0}', space=sflag, size = 0x4, scoped, tag = 'scoped memory for tpu_custom_call.1']
    #allocation7 [shape = 'u8[4096]{0}', space=vmem, size = 0x1000, scoped, tag = 'output window, operand 0, single buffered']
    %14 = vsyncpa [#allocation3], 0
    %15 = vsyncpa [#allocation6], 0
    %16 = vsyncpa [#allocation4], 0
    // Predicated region
    $region2: #{tpu_custom_call.1} parent=1 // pred_check
      _
    $region3: #{tpu_custom_call.1} parent=1 // pred_check_branch
      %18 = sbr.rel (0) target = $region5
    $region4: #{tpu_custom_call.1} parent=1 // pred_region
      _
    $region5: #{tpu_custom_call.1} parent=1 // pred_fallthru
      _
    // Predicated region
    $region6: #{tpu_custom_call.1} parent=1 // pred_check
      _
    $region7: #{tpu_custom_call.1} parent=1 // pred_check_branch
      %20 = sbr.rel (0) target = $region9
    $region8: #{tpu_custom_call.1} parent=1 // pred_region
      %s22 = ssub.s32 128, 128
      %23 = vsyncadd [#allocation3], %s22
      %s25 = sshll.u32 [#allocation2], 4
      %s26 = int_to_ptr.vmem [resolvable:$true] %s25
      %28 = dma.hbm_to_vmem [thread:$0]  %s1, 128, %s26, [#allocation3]
    $region9: #{tpu_custom_call.1} parent=1 // pred_fallthru
      _
    // Predicated region
    $region10: #{tpu_custom_call.1} parent=1 // pred_check
      _
    $region11: #{tpu_custom_call.1} parent=1 // pred_check_branch
      %30 = sbr.rel (0) target = $region13
    $region12: #{tpu_custom_call.1} parent=1 // pred_region
      _
    $region13: #{tpu_custom_call.1} parent=1 // pred_fallthru
      _
    // Predicated region
    $region14: #{tpu_custom_call.1} parent=1 // pred_check
      _
    $region15: #{tpu_custom_call.1} parent=1 // pred_check_branch
      %32 = sbr.rel (0) target = $region17
    $region16: #{tpu_custom_call.1} parent=1 // pred_region
      %s34 = ssub.s32 192, 192
      %35 = vsyncadd [#allocation6], %s34
      %s36 = sshll.u32 [#allocation5], 4
      %s37 = int_to_ptr.vmem [resolvable:$true] %s36
      %42 = dma.hbm_to_vmem [thread:$0]  %s3, 192, %s37, [#allocation6], 64, 64, 4
    $region17: #{tpu_custom_call.1} parent=1 // pred_fallthru
      _
    // Predicated region
    $region18: #{tpu_custom_call.1} parent=1 // pred_check
      _
    $region19: #{tpu_custom_call.1} parent=1 // pred_check_branch
      %44 = sbr.rel (0) target = $region21
    $region20: #{tpu_custom_call.1} parent=1 // pred_region
      _
    $region21: #{tpu_custom_call.1} parent=1 // pred_fallthru
      _
    // Predicated region
    $region22: #{tpu_custom_call.1} parent=1 // pred_check
      _
    $region23: #{tpu_custom_call.1} parent=1 // pred_check_branch
      %46 = sbr.rel (0) target = $region25
    $region24: #{tpu_custom_call.1} parent=1 // pred_region
      _
    $region25: #{tpu_custom_call.1} parent=1 // pred_fallthru
      _
    // Predicated region
    $region26: #{tpu_custom_call.1} parent=1 // pred_check
      _
    $region27: #{tpu_custom_call.1} parent=1 // pred_check_branch
      %48 = sbr.rel (0) target = $region29
    $region28: #{tpu_custom_call.1} parent=1 // pred_region
      _
    $region29: #{tpu_custom_call.1} parent=1 // pred_fallthru
      _
    // Predicated region
    $region30: #{tpu_custom_call.1} parent=1 // pred_check
      _
    $region31: #{tpu_custom_call.1} parent=1 // pred_check_branch
      %50 = sbr.rel (0) target = $region33
    $region32: #{tpu_custom_call.1} parent=1 // pred_region
      _
    $region33: #{tpu_custom_call.1} parent=1 // pred_fallthru
      _
    // Predicated region
    $region34: #{tpu_custom_call.1} parent=1 // pred_check
      _
    $region35: #{tpu_custom_call.1} parent=1 // pred_check_branch
      %52 = sbr.rel (0) target = $region37
    $region36: #{tpu_custom_call.1} parent=1 // pred_region
      _
    $region37: #{tpu_custom_call.1} parent=1 // pred_fallthru
      _
    // Predicated region
    $region38: #{tpu_custom_call.1} parent=1 // pred_check
      _
    $region39: #{tpu_custom_call.1} parent=1 // pred_check_branch
      %54 = sbr.rel (0) target = $region41
    $region40: #{tpu_custom_call.1} parent=1 // pred_region
      %55 = dma.done [#allocation3], 128
    $region41: #{tpu_custom_call.1} parent=1 // pred_fallthru
      _
    // Predicated region
    $region42: #{tpu_custom_call.1} parent=1 // pred_check
      _
    $region43: #{tpu_custom_call.1} parent=1 // pred_check_branch
      %57 = sbr.rel (0) target = $region45
    $region44: #{tpu_custom_call.1} parent=1 // pred_region
      %58 = dma.done [#allocation6], 192
    $region45: #{tpu_custom_call.1} parent=1 // pred_fallthru
      _
    %v60 = vld [vmem:[%s0] sm:$0xff]
    %v61 = vpack.c.bf16 %v60, %v60
    %v62 = vld [vmem:[#allocation2] sm:$0xff]
    %v63 = vpack.c.bf16 %v62, %v62
    %v64 = vld [vmem:[%s2] sm:$0xf]
    %v65 = vld [vmem:[%s2 + $0x4] sm:$0xf]
    %v66 = vld [vmem:[%s2 + $0x8] sm:$0x3]
    %v67 = vld [vmem:[#allocation5] sm:$0xf]
    %v68 = vld [vmem:[#allocation5 + $0x4] sm:$0xf]
    %v69 = vld [vmem:[#allocation5 + $0x8] sm:$0x3]
    %v73 = vunpack.c.l.b16 %v67
    %v74 = vunpack.c.l.b16 %v68
    %v75 = vunpack.c.l.b16 %v69
    %v76 = vpack.c.b16 %v74, %v73
    %v77 = vpack.c.b16 %v75, %v75
    %vm79 = vcmask 162816
    %v81 = vsel %vm79, %v63, 0
    %vm83 = vcmask 1041408
    %v85 = vsel %vm83, %v77, 0
    %87 = vmatprep.subr.bf16.mxu0 0
    %88 = vmatpush1.bf16.msra.mxu0 %v76
    %89 = vmatprep.subr.bf16.mxu0 0
    %90 = vmatpush1.bf16.msra.mxu0 %v85
    %91 = vmatprep.subr.bf16.mxu0 0
    %92 = vmatpush1.bf16.msra.mxu0 0
    %93 = vmatprep.subr.bf16.mxu0 0
    %94 = vmatpush1.bf16.msra.mxu0 0
    %95 = vmatprep.subr.bf16.mxu0 0
    %96 = vmatpush1.bf16.msra.mxu0 0
    %97 = vmatprep.subr.bf16.mxu0 0
    %98 = vmatpush1.bf16.msra.mxu0 0
    %99 = vmatprep.subr.bf16.mxu0 0
    %100 = vmatpush1.bf16.msra.mxu0 0
    %101 = vmatprep.subr.bf16.mxu0 0
    %102 = vmatpush1.bf16.msra.mxu0 0
    %103 = vmatprep.subr.bf16.mxu0 0
    %104 = vmatpush1.bf16.msra.mxu0 0
    %105 = vmatprep.subr.bf16.mxu0 0
    %106 = vmatpush1.bf16.msra.mxu0 0
    %107 = vmatprep.subr.bf16.mxu0 0
    %108 = vmatpush1.bf16.msra.mxu0 0
    %109 = vmatprep.subr.bf16.mxu0 0
    %110 = vmatpush1.bf16.msra.mxu0 0
    %111 = vmatprep.subr.bf16.mxu0 0
    %112 = vmatpush1.bf16.msra.mxu0 0
    %113 = vmatprep.subr.bf16.mxu0 0
    %114 = vmatpush1.bf16.msra.mxu0 0
    %115 = vmatprep.subr.bf16.mxu0 0
    %116 = vmatpush1.bf16.msra.mxu0 0
    %117 = vmatprep.subr.bf16.mxu0 0
    %118 = vmatpush1.bf16.msra.mxu0 0
    %119 = vmatprep.mubr.bf16.mxu0 0
    %120 = vmatmul.mubr.bf16.gmra.mrb[0].mxu0 %v81
    %v121 = vpop.f32.mrb[0].mxu0
    %v122 = vadd.f32 0.0, %v121
    %v123 = vpop.f32.mrb[0].mxu0
    %v124 = vpop.f32.mrb[0].mxu0
    %v125 = vpop.f32.mrb[0].mxu0
    %126 = vdwg.mxu0
    %v130 = vunpack.c.l.b16 %v64
    %v131 = vunpack.c.l.b16 %v65
    %v132 = vunpack.c.l.b16 %v66
    %v133 = vpack.c.b16 %v131, %v130
    %v134 = vpack.c.b16 %v132, %v132
    %v137 = vsel %vm79, %v61, 0
    %v140 = vsel %vm83, %v134, 0
    %142 = vmatprep.subr.bf16.mxu0 0
    %143 = vmatpush1.bf16.msra.mxu0 %v133
    %144 = vmatprep.subr.bf16.mxu0 0
    %145 = vmatpush1.bf16.msra.mxu0 %v140
    %146 = vmatprep.subr.bf16.mxu0 0
    %147 = vmatpush1.bf16.msra.mxu0 0
    %148 = vmatprep.subr.bf16.mxu0 0
    %149 = vmatpush1.bf16.msra.mxu0 0
    %150 = vmatprep.subr.bf16.mxu0 0
    %151 = vmatpush1.bf16.msra.mxu0 0
    %152 = vmatprep.subr.bf16.mxu0 0
    %153 = vmatpush1.bf16.msra.mxu0 0
    %154 = vmatprep.subr.bf16.mxu0 0
    %155 = vmatpush1.bf16.msra.mxu0 0
    %156 = vmatprep.subr.bf16.mxu0 0
    %157 = vmatpush1.bf16.msra.mxu0 0
    %158 = vmatprep.subr.bf16.mxu0 0
    %159 = vmatpush1.bf16.msra.mxu0 0
    %160 = vmatprep.subr.bf16.mxu0 0
    %161 = vmatpush1.bf16.msra.mxu0 0
    %162 = vmatprep.subr.bf16.mxu0 0
    %163 = vmatpush1.bf16.msra.mxu0 0
    %164 = vmatprep.subr.bf16.mxu0 0
    %165 = vmatpush1.bf16.msra.mxu0 0
    %166 = vmatprep.subr.bf16.mxu0 0
    %167 = vmatpush1.bf16.msra.mxu0 0
    %168 = vmatprep.subr.bf16.mxu0 0
    %169 = vmatpush1.bf16.msra.mxu0 0
    %170 = vmatprep.subr.bf16.mxu0 0
    %171 = vmatpush1.bf16.msra.mxu0 0
    %172 = vmatprep.subr.bf16.mxu0 0
    %173 = vmatpush1.bf16.msra.mxu0 0
    %174 = vmatprep.mubr.bf16.mxu0 0
    %175 = vmatmul.mubr.bf16.gmra.mrb[0].mxu0 %v137
    %v176 = vpop.f32.mrb[0].mxu0
    %v177 = vadd.f32 %v122, %v176
    %v178 = vpop.f32.mrb[0].mxu0
    %v179 = vpop.f32.mrb[0].mxu0
    %v180 = vpop.f32.mrb[0].mxu0
    %181 = vdwg.mxu0
    %v182 = vld [vmem:[%s4] sm:$0x1]
    %v184 = vlaneseq
    %v185 = vshrl.u32 %v184, 7
    %v186 = vsub.s32 0, %v185
    %v187 = vrot.slane %v182, %v186
    %v189 = vadd.f32 %v177, %v187
    %v190 = vmax.f32 %v189, 0.0
    %v191 = vpack.c.bf16 %v190, %v190
    %v192 = vld [vmem:[%s5] sm:$0xf]
    %v193 = vld [vmem:[%s5 + $0x4] sm:$0xf]
    %v194 = vld [vmem:[%s5 + $0x8] sm:$0xf]
    %v195 = vld [vmem:[%s5 + $0xc] sm:$0xf]
    %v196 = vld [vmem:[%s5 + $0x10] sm:$0xf]
    %v197 = vld [vmem:[%s5 + $0x14] sm:$0xf]
    %v198 = vld [vmem:[%s5 + $0x18] sm:$0xf]
    %v199 = vld [vmem:[%s5 + $0x1c] sm:$0xf]
    %v200 = vld [vmem:[%s6] sm:$0x1]
    %v202 = vlaneseq
    %v203 = vshrl.u32 %v202, 7
    %v204 = vsub.s32 0, %v203
    %v205 = vrot.slane %v200, %v204
    %v215 = vunpack.c.l.b16 %v192
    %v216 = vunpack.c.l.b16 %v193
    %v217 = vunpack.c.l.b16 %v194
    %v218 = vunpack.c.l.b16 %v195
    %v219 = vunpack.c.l.b16 %v196
    %v220 = vunpack.c.l.b16 %v197
    %v221 = vunpack.c.l.b16 %v198
    %v222 = vunpack.c.l.b16 %v199
    %v223 = vpack.c.b16 %v216, %v215
    %v224 = vpack.c.b16 %v218, %v217
    %v225 = vpack.c.b16 %v220, %v219
    %v226 = vpack.c.b16 %v222, %v221
    %vm231 = vcmask 523264
    %v233 = vsel %vm231, %v191, 0
    %235 = vmatprep.subr.bf16.mxu0 0
    %236 = vmatpush1.bf16.msra.mxu0 %v223
    %237 = vmatprep.subr.bf16.mxu0 0
    %238 = vmatpush1.bf16.msra.mxu0 %v224
    %239 = vmatprep.subr.bf16.mxu0 0
    %240 = vmatpush1.bf16.msra.mxu0 %v225
    %241 = vmatprep.subr.bf16.mxu0 0
    %242 = vmatpush1.bf16.msra.mxu0 %v226
    %243 = vmatprep.subr.bf16.mxu0 0
    %244 = vmatpush1.bf16.msra.mxu0 0
    %245 = vmatprep.subr.bf16.mxu0 0
    %246 = vmatpush1.bf16.msra.mxu0 0
    %247 = vmatprep.subr.bf16.mxu0 0
    %248 = vmatpush1.bf16.msra.mxu0 0
    %249 = vmatprep.subr.bf16.mxu0 0
    %250 = vmatpush1.bf16.msra.mxu0 0
    %251 = vmatprep.subr.bf16.mxu0 0
    %252 = vmatpush1.bf16.msra.mxu0 0
    %253 = vmatprep.subr.bf16.mxu0 0
    %254 = vmatpush1.bf16.msra.mxu0 0
    %255 = vmatprep.subr.bf16.mxu0 0
    %256 = vmatpush1.bf16.msra.mxu0 0
    %257 = vmatprep.subr.bf16.mxu0 0
    %258 = vmatpush1.bf16.msra.mxu0 0
    %259 = vmatprep.subr.bf16.mxu0 0
    %260 = vmatpush1.bf16.msra.mxu0 0
    %261 = vmatprep.subr.bf16.mxu0 0
    %262 = vmatpush1.bf16.msra.mxu0 0
    %263 = vmatprep.subr.bf16.mxu0 0
    %264 = vmatpush1.bf16.msra.mxu0 0
    %265 = vmatprep.subr.bf16.mxu0 0
    %266 = vmatpush1.bf16.msra.mxu0 0
    %267 = vmatprep.mubr.bf16.mxu0 0
    %268 = vmatmul.mubr.bf16.gmra.mrb[0].mxu0 %v233
    %v269 = vpop.f32.mrb[0].mxu0
    %v270 = vadd.f32 %v205, %v269
    %v271 = vpop.f32.mrb[0].mxu0
    %v272 = vpop.f32.mrb[0].mxu0
    %v273 = vpop.f32.mrb[0].mxu0
    %274 = vdwg.mxu0
    %v275 = vmax.f32 %v270, 0.0
    %v276 = vpack.c.bf16 %v275, %v275
    %v277 = vld [vmem:[%s7] sm:$0xf]
    %v278 = vld [vmem:[%s7 + $0x4] sm:$0xf]
    %v279 = vld [vmem:[%s7 + $0x8] sm:$0xf]
    %v280 = vld [vmem:[%s7 + $0xc] sm:$0xf]
    %v281 = vld [vmem:[%s7 + $0x10] sm:$0xf]
    %v282 = vld [vmem:[%s7 + $0x14] sm:$0xf]
    %v283 = vld [vmem:[%s7 + $0x18] sm:$0xf]
    %v284 = vld [vmem:[%s7 + $0x1c] sm:$0xf]
    %v285 = vld [vmem:[%s8] sm:$0x1]
    %v287 = vlaneseq
    %v288 = vshrl.u32 %v287, 7
    %v289 = vsub.s32 0, %v288
    %v290 = vrot.slane %v285, %v289
    %v300 = vunpack.c.l.b16 %v277
    %v301 = vunpack.c.l.b16 %v278
    %v302 = vunpack.c.l.b16 %v279
    %v303 = vunpack.c.l.b16 %v280
    %v304 = vunpack.c.l.b16 %v281
    %v305 = vunpack.c.l.b16 %v282
    %v306 = vunpack.c.l.b16 %v283
    %v307 = vunpack.c.l.b16 %v284
    %v308 = vpack.c.b16 %v301, %v300
    %v309 = vpack.c.b16 %v303, %v302
    %v310 = vpack.c.b16 %v305, %v304
    %v311 = vpack.c.b16 %v307, %v306
    %v317 = vsel %vm231, %v276, 0
    %319 = vmatprep.subr.bf16.mxu0 0
    %320 = vmatpush1.bf16.msra.mxu0 %v308
    %321 = vmatprep.subr.bf16.mxu0 0
    %322 = vmatpush1.bf16.msra.mxu0 %v309
    %323 = vmatprep.subr.bf16.mxu0 0
    %324 = vmatpush1.bf16.msra.mxu0 %v310
    %325 = vmatprep.subr.bf16.mxu0 0
    %326 = vmatpush1.bf16.msra.mxu0 %v311
    %327 = vmatprep.subr.bf16.mxu0 0
    %328 = vmatpush1.bf16.msra.mxu0 0
    %329 = vmatprep.subr.bf16.mxu0 0
    %330 = vmatpush1.bf16.msra.mxu0 0
    %331 = vmatprep.subr.bf16.mxu0 0
    %332 = vmatpush1.bf16.msra.mxu0 0
    %333 = vmatprep.subr.bf16.mxu0 0
    %334 = vmatpush1.bf16.msra.mxu0 0
    %335 = vmatprep.subr.bf16.mxu0 0
    %336 = vmatpush1.bf16.msra.mxu0 0
    %337 = vmatprep.subr.bf16.mxu0 0
    %338 = vmatpush1.bf16.msra.mxu0 0
    %339 = vmatprep.subr.bf16.mxu0 0
    %340 = vmatpush1.bf16.msra.mxu0 0
    %341 = vmatprep.subr.bf16.mxu0 0
    %342 = vmatpush1.bf16.msra.mxu0 0
    %343 = vmatprep.subr.bf16.mxu0 0
    %344 = vmatpush1.bf16.msra.mxu0 0
    %345 = vmatprep.subr.bf16.mxu0 0
    %346 = vmatpush1.bf16.msra.mxu0 0
    %347 = vmatprep.subr.bf16.mxu0 0
    %348 = vmatpush1.bf16.msra.mxu0 0
    %349 = vmatprep.subr.bf16.mxu0 0
    %350 = vmatpush1.bf16.msra.mxu0 0
    %351 = vmatprep.mubr.bf16.mxu0 0
    %352 = vmatmul.mubr.bf16.gmra.mrb[0].mxu0 %v317
    %v353 = vpop.f32.mrb[0].mxu0
    %v354 = vadd.f32 %v290, %v353
    %v355 = vpop.f32.mrb[0].mxu0
    %v356 = vpop.f32.mrb[0].mxu0
    %v357 = vpop.f32.mrb[0].mxu0
    %358 = vdwg.mxu0
    %vm359 = vcmask 48128
    %360 = vst.msk [vmem:[#allocation7] sm:$0xff] %vm359, %v354
    // Predicated region
    $region46: #{tpu_custom_call.1} parent=1 // pred_check
      _
    $region47: #{tpu_custom_call.1} parent=1 // pred_check_branch
      %362 = sbr.rel (0) target = $region49
    $region48: #{tpu_custom_call.1} parent=1 // pred_region
      %s364 = ssub.s32 128, 128
      %365 = vsyncadd [#allocation4], %s364
      %s367 = sshll.u32 [#allocation7], 4
      %s368 = int_to_ptr.vmem [resolvable:$true] %s367
      %370 = dma.vmem_to_hbm [thread:$0]  %s368, 128, %s9, [#allocation4]
    $region49: #{tpu_custom_call.1} parent=1 // pred_fallthru
      _
    // Predicated region
    $region50: #{tpu_custom_call.1} parent=1 // pred_check
      _
    $region51: #{tpu_custom_call.1} parent=1 // pred_check_branch
      %372 = sbr.rel (0) target = $region53
    $region52: #{tpu_custom_call.1} parent=1 // pred_region
      %373 = dma.done [#allocation4], 128
    $region53: #{tpu_custom_call.1} parent=1 // pred_fallthru
      _
    %374 = vsyncpa [#allocation3], 1
    %375 = vsyncpa [#allocation6], 1
    %376 = vsyncpa [#allocation4], 1

</llo_original>
